<compile_context>
chip_gen: v5e
topology: v5e:2x2
jax: 0.10.0
libtpu: 0.0.40
codegen_flags: <defaults>
</compile_context>

<pallas_src>
import functools
import math

import jax
import jax.numpy as jnp
from jax import lax
from jax.experimental import pallas as pl
from jax.experimental.pallas import tpu as pltpu


_STATIC_CHUNK_LIMIT = 16  # <= this many 128-lane chunks: bounded static unroll


# ----------------------------------------------------------------------------
# Pass 1: shifted per-channel sums (training only)
# ----------------------------------------------------------------------------
def _stats_kernel(x_ref, shift_ref, psum_ref, psq_ref, *, n_chunks: int):
    """Accumulate sum(d) / sum(d*d), d = x - shift, into per-n partials.

    x_ref     : VMEM (R, lane_tile)  input dtype   (N dim squeezed)
    shift_ref : VMEM (R, 1)          f32           per-row shift (running mean)
    psum_ref  : VMEM (R, 128)        f32           per-n partial sum   (out)
    psq_ref   : VMEM (R, 128)        f32           per-n partial sumsq (out)
    """
    t = pl.program_id(1)

    @pl.when(t == 0)
    def _():
        psum_ref[...] = jnp.zeros_like(psum_ref)
        psq_ref[...] = jnp.zeros_like(psq_ref)

    R = psum_ref.shape[0]
    # Hoisted broadcast (JAX does not CSE broadcast_in_dim inside loops).
    shift = jnp.broadcast_to(shift_ref[...].astype(jnp.float32), (R, 128))
    zero = jnp.zeros((R, 128), jnp.float32)

    if n_chunks <= _STATIC_CHUNK_LIMIT:
        # Small, bounded static unroll; only the two running partials stay live
        # between chunk iterations.
        ps, pq = zero, zero
        for j in range(n_chunks):
            d = x_ref[:, j * 128:(j + 1) * 128].astype(jnp.float32) - shift
            ps = ps + d
            pq = pq + d * d
    else:
        # Large tiles: fori_loop over 128-lane ref chunks -> no whole-tile f32
        # materialization, bounded vreg live ranges, compact code.
        def body(j, carry):
            ps, pq = carry
            off = pl.multiple_of(j * 128, 128)
            d = x_ref[:, pl.ds(off, 128)].astype(jnp.float32) - shift
            return ps + d, pq + d * d

        ps, pq = lax.fori_loop(0, n_chunks, body, (zero, zero), unroll=4)

    psum_ref[...] += ps
    psq_ref[...] += pq


# ----------------------------------------------------------------------------
# Pass 2: standardization
# ----------------------------------------------------------------------------
def _normalize_kernel(x_ref, mean_ref, isd_ref, z_ref):
    """z = (x - new_mean) * inv_std, written in the input dtype."""
    # TODO(synk): on v6e/v7x a native-bf16 compute path (cast mean/isd to the
    # input dtype once per tile) would halve vreg pressure; kept f32 for
    # accuracy and v5e compatibility.
    xf = x_ref[...].astype(jnp.float32)
    z_ref[...] = ((xf - mean_ref[...]) * isd_ref[...]).astype(z_ref.dtype)


# ----------------------------------------------------------------------------
# Layout / sizing helpers
# ----------------------------------------------------------------------------
def _vmem_capacity_bytes() -> int:
    try:
        cap = getattr(pltpu.get_tpu_info(), "vmem_capacity_bytes", None)
        if cap:
            return int(cap)
    except Exception:
        pass
    return 64 * 1024 * 1024  # conservative fallback: v7x per-TensorCore VMEM


def _row_fold(c: int, hw: int, itemsize: int) -> int:
    """Sublane packing factor G: pack G contiguous HW segments of one channel
    onto the sublane axis so R = C*G fills a vreg's sublanes."""
    sub_min = {4: 8, 2: 16, 1: 32}.get(itemsize, 8)
    g = sub_min // math.gcd(c, sub_min)          # power of two
    while g > 1 and hw < g * 128:                # don't fold tiny inputs
        g //= 2
    return g


def _choose_lane_geometry(hw: int, r: int, g: int, itemsize: int,
                          target_bytes: int):
    """Pick (L, lane_tile): per-row length L (multiple of 128, >= hw/g) and a
    lane tile that divides it, keeping an (R, lane_tile) block near
    `target_bytes`.  Pads L a bit further when hw has poor divisors."""
    l_min = -(-hw // (g * 128)) * 128
    max_lane = max(128, (target_bytes // max(r * itemsize, 1)) // 128 * 128)
    if l_min <= max_lane:
        return l_min, l_min
    best = 128
    t = 128
    while t <= max_lane:
        if l_min % t == 0:
            best = t
        t += 128
    if best * 2 < max_lane:
        l_pad = -(-l_min // max_lane) * max_lane
        if (l_pad - l_min) * 8 <= l_min:          # <= 12.5% extra padding
            return l_pad, max_lane
    return l_min, best


# ----------------------------------------------------------------------------
# Wrapper
# ----------------------------------------------------------------------------
def running_norm_forward(x_nchw, running_mean, running_var, num_batches_tracked,
                         *, eps: float = 1e-5, momentum=None,
                         training: bool = True):
    """Functional RunningNorm(kept_axes=1, kept_shape=C).forward on NCHW input.

    Returns (z_nchw, new_running_mean, new_running_var, new_num_batches_tracked).
    """
    # TODO(synk): only the NCHW / kept_axes=(1,) layout is implemented; other
    # kept_axes combinations of the module are not translated here.
    N, C, H, W = x_nchw.shape
    HW = H * W
    M = N * HW
    dt = x_nchw.dtype
    itemsize = jnp.dtype(dt).itemsize

    # Generation-aware tiling / VMEM budget: v7x has 64 MiB VMEM per TC vs
    # 128 MiB on v5e/v6e.  Budget covers double-buffered in+out blocks plus
    # f32 intermediates for sub-f32 inputs.
    if _vmem_capacity_bytes() >= 96 * 1024 * 1024:    # v5e / v6e
        target_block, vmem_limit = 4 << 20, 48 << 20
    else:                                             # v7x
        target_block, vmem_limit = 2 << 20, 28 << 20

    g = _row_fold(C, HW, itemsize)
    R = C * g
    L, lane_tile = _choose_lane_geometry(HW, R, g, itemsize, target_block)
    HW_pad = g * L
    pad = HW_pad - HW
    T = L // lane_tile
    n_chunks = lane_tile // 128
    # TODO(synk): for extremely large C (R*128*itemsize >> target_block) the
    # channel axis should additionally be split across the grid.

    x3 = x_nchw.reshape(N, C, HW)
    if pad:
        x3 = jnp.pad(x3, ((0, 0), (0, 0), (0, pad)))
    xr = x3.reshape(N, R, L)                       # pure reshape, no transpose

    rm = running_mean.astype(jnp.float32).reshape(C)
    rv = running_var.astype(jnp.float32).reshape(C)

    x_spec = pl.BlockSpec((pl.Squeezed(), R, lane_tile), lambda n, t: (n, 0, t))
    vec_spec = pl.BlockSpec((R, 1), lambda n, t: (0, 0))

    if training:
        new_nbt = num_batches_tracked + 1
        if momentum is None:
            alpha = 1.0 / jnp.asarray(new_nbt, jnp.float32)   # CMA, traced-safe
        else:
            alpha = jnp.float32(momentum)

        shift_r = jnp.repeat(rm, g).reshape(R, 1)             # per-row shift

        stats_cost = pl.CostEstimate(
            flops=int(4 * N * R * L), transcendentals=0,
            bytes_accessed=int(N * R * L * itemsize + 2 * N * R * 128 * 4))

        psum, psq = pl.pallas_call(
            functools.partial(_stats_kernel, n_chunks=n_chunks),
            grid=(N, T),
            out_shape=(jax.ShapeDtypeStruct((N, R, 128), jnp.float32),
                       jax.ShapeDtypeStruct((N, R, 128), jnp.float32)),
            in_specs=[x_spec, vec_spec],
            out_specs=(
                pl.BlockSpec((pl.Squeezed(), R, 128), lambda n, t: (n, 0, 0)),
                pl.BlockSpec((pl.Squeezed(), R, 128), lambda n, t: (n, 0, 0)),
            ),
            compiler_params=pltpu.CompilerParams(
                dimension_semantics=("parallel", "arbitrary"),
                vmem_limit_bytes=vmem_limit),
            cost_estimate=stats_cost,
        )(xr, shift_r)

        # Tiny finalize in plain JAX: lane/row reduce, padding correction,
        # running-stat blend (alpha handled here, no SMEM scalar needed).
        s_d = psum.reshape(N, C, g, 128).sum(axis=(0, 2, 3))
        s_d2 = psq.reshape(N, C, g, 128).sum(axis=(0, 2, 3))
        if pad:
            pad_cnt = float(N * pad)               # padded zeros: d = -shift
            s_d = s_d + pad_cnt * rm
            s_d2 = s_d2 - pad_cnt * rm * rm
        mean_d = s_d / float(M)
        batch_mean = rm + mean_d
        # Unbiased variance (torch.var_mean default), shifted-sum form avoids
        # E[x^2]-E[x]^2 cancellation.
        batch_var = jnp.maximum(s_d2 - float(M) * mean_d * mean_d, 0.0) \
            / float(max(M - 1, 1))
        new_mean = (1.0 - alpha) * rm + alpha * batch_mean
        new_var = (1.0 - alpha) * rv + alpha * batch_var
    else:
        new_nbt = num_batches_tracked
        new_mean, new_var = rm, rv

    inv_std = lax.rsqrt(new_var + jnp.float32(eps))
    mean_r = jnp.repeat(new_mean, g).reshape(R, 1)
    isd_r = jnp.repeat(inv_std, g).reshape(R, 1)

    norm_cost = pl.CostEstimate(
        flops=int(2 * N * R * L), transcendentals=0,
        bytes_accessed=int(2 * N * R * L * itemsize + 2 * R * 4))

    z_r = pl.pallas_call(
        _normalize_kernel,
        grid=(N, T),
        out_shape=jax.ShapeDtypeStruct((N, R, L), dt),
        in_specs=[x_spec, vec_spec, vec_spec],
        out_specs=x_spec,
        compiler_params=pltpu.CompilerParams(
            dimension_semantics=("parallel", "parallel"),
            vmem_limit_bytes=vmem_limit),
        cost_estimate=norm_cost,
    )(xr, mean_r, isd_r)

    z3 = z_r.reshape(N, C, HW_pad)
    if pad:
        z3 = z3[:, :, :HW]
    z_nchw = z3.reshape(N, C, H, W)
    return z_nchw, new_mean, new_var, new_nbt


# ----------------------------------------------------------------------------
# Plain-JAX reference (mirrors the PyTorch forward)
# ----------------------------------------------------------------------------
def _reference(x_nchw, running_mean, running_var, num_batches_tracked,
               eps=1e-5, momentum=None, training=True):
    N, C, H, W = x_nchw.shape
    x = x_nchw.astype(jnp.float32)
    if training:
        new_nbt = num_batches_tracked + 1
        alpha = 1.0 / float(new_nbt) if momentum is None else float(momentum)
        batch_mean = jnp.mean(x, axis=(0, 2, 3))
        n = N * H * W
        batch_var = jnp.sum((x - batch_mean[None, :, None, None]) ** 2,
                            axis=(0, 2, 3)) / max(n - 1, 1)
        new_mean = (1 - alpha) * running_mean + alpha * batch_mean
        new_var = (1 - alpha) * running_var + alpha * batch_var
    else:
        new_nbt = num_batches_tracked
        new_mean, new_var = running_mean, running_var
    z = (x - new_mean[None, :, None, None]) / \
        jnp.sqrt(new_var + eps)[None, :, None, None]
    return z, new_mean, new_var, new_nbt


if __name__ == "__main__":
    key = jax.random.PRNGKey(0)
    k1, k2, k3, k4 = jax.random.split(key, 4)

    # Case 1: C=4 (exercises sublane row-folding G=2), no padding needed.
    N, C, H, W = 2, 4, 16, 16
    x = jax.random.normal(k1, (N, C, H, W), jnp.float32) * 3.0 + 1.5
    rm0 = jnp.zeros((C,), jnp.float32)
    rv0 = jnp.ones((C,), jnp.float32)

    z, new_rm, new_rv, new_nbt = running_norm_forward(
        x, rm0, rv0, 0, eps=1e-5, momentum=None, training=True)
    jax.block_until_ready((z, new_rm, new_rv))
    z_ref, rm_ref, rv_ref, _ = _reference(x, rm0, rv0, 0, training=True)
    assert z.shape == x.shape and z.dtype == x.dtype
    assert jnp.allclose(z, z_ref, atol=1e-4, rtol=1e-4)
    assert jnp.allclose(new_rm, rm_ref, atol=1e-5, rtol=1e-5)
    assert jnp.allclose(new_rv, rv_ref, atol=1e-4, rtol=1e-4)

    # Inference with the updated stats (stats pass skipped entirely).
    z_inf, rm_i, rv_i, nbt_i = running_norm_forward(
        x, new_rm, new_rv, new_nbt, eps=1e-5, momentum=None, training=False)
    jax.block_until_ready(z_inf)
    z_inf_ref, _, _, _ = _reference(x, new_rm, new_rv, new_nbt, training=False)
    assert jnp.allclose(z_inf, z_inf_ref, atol=1e-4, rtol=1e-4)
    assert jnp.allclose(rm_i, new_rm) and jnp.allclose(rv_i, new_rv)
    assert int(nbt_i) == int(new_nbt)

    # Case 2: ragged H*W (144 -> padded to 256 lanes), nonzero running stats
    # (exercises the shifted-sum padding correction) and EMA momentum.
    N2, C2, H2, W2 = 2, 8, 12, 12
    x2 = jax.random.normal(k2, (N2, C2, H2, W2), jnp.float32) * 0.7 - 2.0
    rm2 = jax.random.normal(k3, (C2,), jnp.float32)
    rv2 = jax.random.uniform(k4, (C2,), jnp.float32, minval=0.5, maxval=2.0)

    z2, nm2, nv2, nbt2 = running_norm_forward(
        x2, rm2, rv2, 3, eps=1e-5, momentum=0.2, training=True)
    jax.block_until_ready((z2, nm2, nv2))
    z2_ref, nm2_ref, nv2_ref, _ = _reference(
        x2, rm2, rv2, 3, momentum=0.2, training=True)
    assert jnp.allclose(z2, z2_ref, atol=1e-4, rtol=1e-4)
    assert jnp.allclose(nm2, nm2_ref, atol=1e-5, rtol=1e-5)
    assert jnp.allclose(nv2, nv2_ref, atol=1e-4, rtol=1e-4)
    assert int(nbt2) == 4

    print("KERNEL_OK")
</pallas_src>

<mosaic_0001>
module attributes {stable_mosaic.version = 11 : i64} {
  func.func @_stats_kernel(%arg0: i32, %arg1: i32, %arg2: memref<1x8x128xf32, #tpu.memory_space<vmem>>, %arg3: memref<8x1xf32, #tpu.memory_space<vmem>>, %arg4: memref<1x8x128xf32, #tpu.memory_space<vmem>>, %arg5: memref<1x8x128xf32, #tpu.memory_space<vmem>>) attributes {dimension_semantics = [#tpu.dimension_semantics<parallel>, #tpu.dimension_semantics<arbitrary>], iteration_bounds = array<i64: 2, 1>, scalar_prefetch = 0 : i64, scratch_operands = 0 : i64, tpu.core_type = #tpu.core_type<tc>, window_params = [{transform_indices = @transform_0, window_bounds = array<i64: 1, 8, 128>}, {pipeline_mode = #tpu.pipeline_mode<synchronous>, transform_indices = @transform_1, window_bounds = array<i64: 8, 1>}, {transform_indices = @transform_2, window_bounds = array<i64: 1, 8, 128>}, {transform_indices = @transform_3, window_bounds = array<i64: 1, 8, 128>}]} {
    %c0_i32 = arith.constant 0 : i32
    %0 = arith.cmpi eq, %arg1, %c0_i32 : i32
    %1 = arith.extui %0 : i1 to i32
    %c0_i32_0 = arith.constant 0 : i32
    %2 = arith.cmpi ne, %1, %c0_i32_0 : i32
    scf.if %2 {
      %cst_17 = arith.constant 0.000000e+00 : f32
      %25 = vector.broadcast %cst_17 : f32 to vector<8x128xf32>
      %c0_18 = arith.constant 0 : index
      %c0_19 = arith.constant 0 : index
      %c0_20 = arith.constant 0 : index
      %26 = vector.load %arg4[%c0_18, %c0_19, %c0_20] : memref<1x8x128xf32, #tpu.memory_space<vmem>>, vector<1x8x128xf32>
      %27 = vector.shape_cast %26 : vector<1x8x128xf32> to vector<8x128xf32>
      %28 = vector.shape_cast %25 : vector<8x128xf32> to vector<1x8x128xf32>
      tpu.vector_store %arg4[%c0_18, %c0_19, %c0_20], %28 {strides = array<i32>} : memref<1x8x128xf32, #tpu.memory_space<vmem>>, vector<1x8x128xf32>,
      %cst_21 = arith.constant 0.000000e+00 : f32
      %29 = vector.broadcast %cst_21 : f32 to vector<8x128xf32>
      %c0_22 = arith.constant 0 : index
      %c0_23 = arith.constant 0 : index
      %c0_24 = arith.constant 0 : index
      %30 = vector.load %arg5[%c0_22, %c0_23, %c0_24] : memref<1x8x128xf32, #tpu.memory_space<vmem>>, vector<1x8x128xf32>
      %31 = vector.shape_cast %30 : vector<1x8x128xf32> to vector<8x128xf32>
      %32 = vector.shape_cast %29 : vector<8x128xf32> to vector<1x8x128xf32>
      tpu.vector_store %arg5[%c0_22, %c0_23, %c0_24], %32 {strides = array<i32>} : memref<1x8x128xf32, #tpu.memory_space<vmem>>, vector<1x8x128xf32>,
    } else {
    }
    %c0 = arith.constant 0 : index
    %c0_1 = arith.constant 0 : index
    %3 = vector.load %arg3[%c0, %c0_1] : memref<8x1xf32, #tpu.memory_space<vmem>>, vector<8x1xf32>
    %4 = vector.shape_cast %3 : vector<8x1xf32> to vector<8x1xf32>
    %5 = vector.broadcast %4 : vector<8x1xf32> to vector<8x128xf32>
    %cst = arith.constant 0.000000e+00 : f32
    %6 = vector.broadcast %cst : f32 to vector<8x128xf32>
    %c0_2 = arith.constant 0 : index
    %c0_3 = arith.constant 0 : index
    %c0_4 = arith.constant 0 : index
    %7 = vector.load %arg2[%c0_2, %c0_3, %c0_4] : memref<1x8x128xf32, #tpu.memory_space<vmem>>, vector<1x8x128xf32>
    %8 = vector.shape_cast %7 : vector<1x8x128xf32> to vector<8x128xf32>
    %9 = arith.subf %8, %5 : vector<8x128xf32>
    %10 = arith.addf %6, %9 : vector<8x128xf32>
    %11 = arith.mulf %9, %9 : vector<8x128xf32>
    %12 = arith.addf %6, %11 : vector<8x128xf32>
    %c0_5 = arith.constant 0 : index
    %c0_6 = arith.constant 0 : index
    %c0_7 = arith.constant 0 : index
    %13 = vector.load %arg4[%c0_5, %c0_6, %c0_7] : memref<1x8x128xf32, #tpu.memory_space<vmem>>, vector<1x8x128xf32>
    %14 = vector.shape_cast %13 : vector<1x8x128xf32> to vector<8x128xf32>
    %15 = arith.addf %14, %10 : vector<8x128xf32>
    %c0_8 = arith.constant 0 : index
    %c0_9 = arith.constant 0 : index
    %c0_10 = arith.constant 0 : index
    %16 = vector.load %arg4[%c0_8, %c0_9, %c0_10] : memref<1x8x128xf32, #tpu.memory_space<vmem>>, vector<1x8x128xf32>
    %17 = vector.shape_cast %16 : vector<1x8x128xf32> to vector<8x128xf32>
    %18 = vector.shape_cast %15 : vector<8x128xf32> to vector<1x8x128xf32>
    tpu.vector_store %arg4[%c0_8, %c0_9, %c0_10], %18 {strides = array<i32>} : memref<1x8x128xf32, #tpu.memory_space<vmem>>, vector<1x8x128xf32>,
    %c0_11 = arith.constant 0 : index
    %c0_12 = arith.constant 0 : index
    %c0_13 = arith.constant 0 : index
    %19 = vector.load %arg5[%c0_11, %c0_12, %c0_13] : memref<1x8x128xf32, #tpu.memory_space<vmem>>, vector<1x8x128xf32>
    %20 = vector.shape_cast %19 : vector<1x8x128xf32> to vector<8x128xf32>
    %21 = arith.addf %20, %12 : vector<8x128xf32>
    %c0_14 = arith.constant 0 : index
    %c0_15 = arith.constant 0 : index
    %c0_16 = arith.constant 0 : index
    %22 = vector.load %arg5[%c0_14, %c0_15, %c0_16] : memref<1x8x128xf32, #tpu.memory_space<vmem>>, vector<1x8x128xf32>
    %23 = vector.shape_cast %22 : vector<1x8x128xf32> to vector<8x128xf32>
    %24 = vector.shape_cast %21 : vector<8x128xf32> to vector<1x8x128xf32>
    tpu.vector_store %arg5[%c0_14, %c0_15, %c0_16], %24 {strides = array<i32>} : memref<1x8x128xf32, #tpu.memory_space<vmem>>, vector<1x8x128xf32>,
    return
  }
  func.func @transform_0(%arg0: i32, %arg1: i32) -> (i32, i32, i32) {
    %c0_i32 = arith.constant 0 : i32
    %c0_i32_0 = arith.constant 0 : i32
    return %arg0, %c0_i32, %arg1 : i32, i32, i32
  }
  func.func @transform_1(%arg0: i32, %arg1: i32) -> (i32, i32) {
    %c0_i32 = arith.constant 0 : i32
    %c0_i32_0 = arith.constant 0 : i32
    %c0_i32_1 = arith.constant 0 : i32
    return %c0_i32, %c0_i32_0 : i32, i32
  }
  func.func @transform_2(%arg0: i32, %arg1: i32) -> (i32, i32, i32) {
    %c0_i32 = arith.constant 0 : i32
    %c0_i32_0 = arith.constant 0 : i32
    %c0_i32_1 = arith.constant 0 : i32
    return %arg0, %c0_i32, %c0_i32_0 : i32, i32, i32
  }
  func.func @transform_3(%arg0: i32, %arg1: i32) -> (i32, i32, i32) {
    %c0_i32 = arith.constant 0 : i32
    %c0_i32_0 = arith.constant 0 : i32
    %c0_i32_1 = arith.constant 0 : i32
    return %arg0, %c0_i32, %c0_i32_0 : i32, i32, i32
  }
}

</mosaic_0001>

<llo_original>
// kernel: tpu_custom_call.1
$region0: #{tpu_custom_call.1}
  #allocation0 [shape = 'u32[]', space=smem, size = 0x4, offset = 0x4, fixed_abs, tag = 'smem constant byte address 0x4 - core index']
  #allocation1 [shape = 'u32[72,128]{1,0:T(1,128)}', space=vmem, size = 0x9000, scoped, tag = 'internal scratch']
  %s0 = inlined_call_operand.hbm [shape: f32[2,8,128], index: 0, kind: input, shape index: {}]
  %s1 = inlined_call_operand.vmem [shape: f32[8,1], index: 1, kind: input, shape index: {}]
  %s2 = inlined_call_operand.hbm [shape: f32[2,8,128], index: 2, kind: output, shape index: {0}]
  %s3 = inlined_call_operand.hbm [shape: f32[2,8,128], index: 3, kind: output, shape index: {1}]
  %4 = xla_tuple %s2, %s3
  %s5 = sld [smem:[#allocation0]]
  $region57: #{tpu_custom_call.1} parent=0
    _
  %s7 = ssub.s32 1, %s5
  %s8 = scalar_select 0, %s7, %s5
  $region1: #{tpu_custom_call.1} parent=0
    #allocation2 [shape = 'u8[8192]{0}', space=vmem, size = 0x2000, scoped, tag = 'input window, operand 0']
    #allocation3 [shape = 's32[2]{0}', space=sflag, size = 0x8, scoped, tag = 'scoped memory for tpu_custom_call.1']
    #allocation4 [shape = 's32[2]{0}', space=sflag, size = 0x8, scoped, tag = 'scoped memory for tpu_custom_call.1']
    #allocation5 [shape = 'u8[8192]{0}', space=vmem, size = 0x2000, scoped, tag = 'output window, operand 0']
    #allocation6 [shape = 'u8[8192]{0}', space=vmem, size = 0x2000, scoped, tag = 'output window, operand 1']
    #allocation7 [shape = 's32[2]{0}', space=sflag, size = 0x8, scoped, tag = 'scoped memory for tpu_custom_call.1']
    %9 = vsyncpa [#allocation3], 0
    %s10 = scalar_lea.sflag [#allocation3], 1
    %11 = vsyncpa %s10, 0
    %12 = vsyncpa [#allocation4], 0
    %s13 = scalar_lea.sflag [#allocation4], 1
    %14 = vsyncpa %s13, 0
    %15 = vsyncpa [#allocation7], 0
    %s16 = scalar_lea.sflag [#allocation7], 1
    %17 = vsyncpa %s16, 0
    loop: start=0, step=1, limit=4
    $region2: #{tpu_custom_call.1} parent=1 // loop_pre_header
      _
    $region3: #{tpu_custom_call.1} parent=1 // loop_header
      %s19 = sphi 0, %s23
      %p20 = scmp.ge.s32.totalorder %s19, 4
      %s26 = sphi 0, %s38
      %s27 = sphi 0, %s34
      %s28 = sphi 0, %s26
      %s29 = sphi 0, %s27
      %s30 = sphi 0, %s28
      %s31 = sphi 0, %s29
      %s43 = sphi 0, %s45
      %s46 = sphi 0, %s43
      %s47 = sphi 0, %s46
      %s63 = sphi 0, %s47
      %s67 = sphi 0, %s67
      %s69 = sphi 0, %s67
      %s70 = sphi 0, %s69
      %s84 = sphi 0, %s70
      %s90 = sphi 0, %s92
      %s93 = sphi 0, %s90
      %s94 = sphi 0, %s93
      %s110 = sphi 0, %s94
      %s116 = sphi 0, %s118
      %s119 = sphi 0, %s116
      %s120 = sphi 0, %s119
      %s136 = sphi 0, %s120
    $region4: #{tpu_custom_call.1} parent=1 // loop_header_branch
      %22 = sbr.rel (%p20) target = $region8
    $region5: #{tpu_custom_call.1} parent=1 // loop_body
      %s24 = ssub.s32 %s19, 1
      %s25 = ssub.s32 %s19, 2
      %s32 = sadd.s32 1, %s27
      %p33 = scmp.ge.s32.totalorder %s32, 1
      %s34 = scalar_select %p33, 0, %s32
      %s35 = sadd.s32 1, %s26
      %s36 = scalar_select %p33, %s35, %s26
      %p37 = scmp.ge.s32.totalorder %s36, 2
      %s38 = scalar_select %p37, 0, %s36
      %s39 = ssub.s32 %s26, %s38
      %s40 = ssub.s32 %s27, %s34
      %s41 = sor.u32 %s39, %s40
      %p42 = scmp.eq.s32.totalorder %s41, 0
      %s44 = sadd.s32 %s43, 1
      %s45 = scalar_select %p42, %s43, %s44
      %p48 = pneg %p42
      %p49 = scmp.eq.s32.totalorder %s19, 1
      %p50 = por %p48, %p49
      %p51 = scmp.ne.s32.totalorder %s43, %s46
      %p52 = scmp.eq.s32.totalorder %s19, 0
      %p53 = por %p51, %p52
      %p54 = scmp.ne.s32.totalorder %s43, %s46
      %p55 = scmp.eq.s32.totalorder %s24, 1
      %p56 = por %p54, %p55
      %p57 = scmp.ne.s32.totalorder %s46, %s47
      %p58 = scmp.eq.s32.totalorder %s24, 0
      %p59 = por %p57, %p58
      %p60 = scmp.ne.s32.totalorder %s46, %s47
      %p61 = scmp.eq.s32.totalorder %s25, 1
      %p62 = por %p60, %p61
      %p64 = scmp.ne.s32.totalorder %s47, %s63
      %p65 = scmp.eq.s32.totalorder %s25, 0
      %p66 = por %p64, %p65
      %s68 = sadd.s32 %s67, 1
      %p71 = scmp.eq.s32.totalorder %s19, 1
      %p72 = scmp.ne.s32.totalorder %s67, %s69
      %p73 = scmp.eq.s32.totalorder %s19, 0
      %p74 = por %p72, %p73
      %p75 = scmp.ne.s32.totalorder %s67, %s69
      %p76 = scmp.eq.s32.totalorder %s24, 1
      %p77 = por %p75, %p76
      %p78 = scmp.ne.s32.totalorder %s69, %s70
      %p79 = scmp.eq.s32.totalorder %s24, 0
      %p80 = por %p78, %p79
      %p81 = scmp.ne.s32.totalorder %s69, %s70
      %p82 = scmp.eq.s32.totalorder %s25, 1
      %p83 = por %p81, %p82
      %p85 = scmp.ne.s32.totalorder %s70, %s84
      %p86 = scmp.eq.s32.totalorder %s25, 0
      %p87 = por %p85, %p86
      %s88 = ssub.s32 %s26, %s38
      %p89 = scmp.eq.s32.totalorder %s88, 0
      %s91 = sadd.s32 %s90, 1
      %s92 = scalar_select %p89, %s90, %s91
      %p95 = pneg %p89
      %p96 = scmp.eq.s32.totalorder %s19, 1
      %p97 = por %p95, %p96
      %p98 = scmp.ne.s32.totalorder %s90, %s93
      %p99 = scmp.eq.s32.totalorder %s19, 0
      %p100 = por %p98, %p99
      %p101 = scmp.ne.s32.totalorder %s90, %s93
      %p102 = scmp.eq.s32.totalorder %s24, 1
      %p103 = por %p101, %p102
      %p104 = scmp.ne.s32.totalorder %s93, %s94
      %p105 = scmp.eq.s32.totalorder %s24, 0
      %p106 = por %p104, %p105
      %p107 = scmp.ne.s32.totalorder %s93, %s94
      %p108 = scmp.eq.s32.totalorder %s25, 1
      %p109 = por %p107, %p108
      %p111 = scmp.ne.s32.totalorder %s94, %s110
      %p112 = scmp.eq.s32.totalorder %s25, 0
      %p113 = por %p111, %p112
      %s114 = ssub.s32 %s26, %s38
      %p115 = scmp.eq.s32.totalorder %s114, 0
      %s117 = sadd.s32 %s116, 1
      %s118 = scalar_select %p115, %s116, %s117
      %p121 = pneg %p115
      %p122 = scmp.eq.s32.totalorder %s19, 1
      %p123 = por %p121, %p122
      %p124 = scmp.ne.s32.totalorder %s116, %s119
      %p125 = scmp.eq.s32.totalorder %s19, 0
      %p126 = por %p124, %p125
      %p127 = scmp.ne.s32.totalorder %s116, %s119
      %p128 = scmp.eq.s32.totalorder %s24, 1
      %p129 = por %p127, %p128
      %p130 = scmp.ne.s32.totalorder %s119, %s120
      %p131 = scmp.eq.s32.totalorder %s24, 0
      %p132 = por %p130, %p131
      %p133 = scmp.ne.s32.totalorder %s119, %s120
      %p134 = scmp.eq.s32.totalorder %s25, 1
      %p135 = por %p133, %p134
      %p137 = scmp.ne.s32.totalorder %s120, %s136
      %p138 = scmp.eq.s32.totalorder %s25, 0
      %p139 = por %p137, %p138
      %p140 = scmp.le.s32.totalorder 1, %s19
      %p141 = scmp.lt.s32.totalorder %s19, 3
      %p142 = pnand %p140, %p141
      %p143 = pneg %p142
      // Predicated region
      $region9: #{tpu_custom_call.1} parent=5 // pred_check
        _
      $region10: #{tpu_custom_call.1} parent=5 // pred_check_branch
        %145 = sbr.rel (%p142) target = $region12
      $region11: #{tpu_custom_call.1} parent=5 // pred_region
        %s146 = ssub.s32 %s19, 1
        // Predicated region
        $region13: #{tpu_custom_call.1} parent=11 // pred_check
          %p147 = pneg %p80
        $region14: #{tpu_custom_call.1} parent=11 // pred_check_branch
          %149 = sbr.rel (%p147) target = $region16
        $region15: #{tpu_custom_call.1} parent=11 // pred_region
          _
        $region16: #{tpu_custom_call.1} parent=11 // pred_fallthru
          _
      $region12: #{tpu_custom_call.1} parent=5 // pred_fallthru
        _
      %p150 = scmp.lt.s32.totalorder %s19, 2
      // Predicated region
      $region17: #{tpu_custom_call.1} parent=5 // pred_check
        %p151 = pneg %p150
      $region18: #{tpu_custom_call.1} parent=5 // pred_check_branch
        %153 = sbr.rel (%p151) target = $region20
      $region19: #{tpu_custom_call.1} parent=5 // pred_region
        // Predicated region
        $region21: #{tpu_custom_call.1} parent=19 // pred_check
          %p154 = pneg %p53
        $region22: #{tpu_custom_call.1} parent=19 // pred_check_branch
          %156 = sbr.rel (%p154) target = $region24
        $region23: #{tpu_custom_call.1} parent=19 // pred_region
          %s157 = sand.u32 %s43, 1
          %s158 = scalar_lea.sflag [#allocation3], %s157
          %s159 = sand.u32 %s43, 1
          %s160 = smul.addr %s159, 8
          %s161 = scalar_lea.vmem [#allocation2], %s160
          %163 = vsyncadd %s158, 0
          %s164 = sadd.s32 %s27, %s26
          %s165 = smul.addr %s164, 8
          %s166 = scalar_lea.hbm %s0, %s165
          %s168 = sshll.u32 %s166, 4
          %s169 = int_to_ptr.hbm [resolvable:$true] %s168
          %s170 = sshll.u32 %s161, 4
          %s171 = int_to_ptr.vmem [resolvable:$true] %s170
          %173 = dma.hbm_to_vmem [thread:$0]  %s169, 128, %s171, %s158
        $region24: #{tpu_custom_call.1} parent=19 // pred_fallthru
          _
      $region20: #{tpu_custom_call.1} parent=5 // pred_fallthru
        _
      %p174 = scmp.le.s32.totalorder 1, %s19
      %p175 = scmp.lt.s32.totalorder %s19, 3
      %p176 = pnand %p174, %p175
      %p177 = pneg %p176
      // Predicated region
      $region25: #{tpu_custom_call.1} parent=5 // pred_check
        _
      $region26: #{tpu_custom_call.1} parent=5 // pred_check_branch
        %179 = sbr.rel (%p176) target = $region28
      $region27: #{tpu_custom_call.1} parent=5 // pred_region
        %s180 = ssub.s32 %s19, 1
        %s181 = sand.u32 %s46, 1
        %s182 = scalar_lea.sflag [#allocation3], %s181
        %s183 = sand.u32 %s46, 1
        %s184 = smul.addr %s183, 8
        %s185 = scalar_lea.vmem [#allocation2], %s184
        // Predicated region
        $region29: #{tpu_custom_call.1} parent=27 // pred_check
          %p186 = pneg %p59
        $region30: #{tpu_custom_call.1} parent=27 // pred_check_branch
          %188 = sbr.rel (%p186) target = $region32
        $region31: #{tpu_custom_call.1} parent=27 // pred_region
          %190 = dma.done %s182, 128
        $region32: #{tpu_custom_call.1} parent=27 // pred_fallthru
          _
        %s191 = sand.u32 %s46, 1
        %s192 = scalar_lea.sflag [#allocation3], %s191
        %s193 = sand.u32 %s46, 1
        %s194 = smul.addr %s193, 8
        %s195 = scalar_lea.vmem [#allocation2], %s194
        %p196 = pneg %p59
        %p197 = pneg %p56
        %p198 = pneg %p80
        %p199 = pneg %p77
        %p200 = pneg %p106
        %p201 = pneg %p103
        %s202 = sand.u32 %s93, 1
        %s203 = scalar_lea.sflag [#allocation4], %s202
        %s204 = sand.u32 %s93, 1
        %s205 = smul.addr %s204, 8
        %s206 = scalar_lea.vmem [#allocation5], %s205
        %p207 = pneg %p132
        %p208 = pneg %p129
        %s209 = sand.u32 %s119, 1
        %s210 = scalar_lea.sflag [#allocation7], %s209
        %s211 = sand.u32 %s119, 1
        %s212 = smul.addr %s211, 8
        %s213 = scalar_lea.vmem [#allocation6], %s212
        %p214 = scmp.eq.s32.totalorder %s29, 0
        // Predicated region
        $region33: #{tpu_custom_call.1} parent=27 // pred_check
          %p215 = pneg %p214
        $region34: #{tpu_custom_call.1} parent=27 // pred_check_branch
          %217 = sbr.rel (%p215) target = $region36
        $region35: #{tpu_custom_call.1} parent=27 // pred_region
          %218 = vst [vmem:[%s206] sm:$0xff] 0.0
          %219 = vst [vmem:[%s213] sm:$0xff] 0.0
        $region36: #{tpu_custom_call.1} parent=27 // pred_fallthru
          _
        %v220 = vld [vmem:[%s1] sm:$0xff]
        %222 = vset.pattern.permute.xlu0 0
        %223 = vperm.xlu0 %222, %v220
        %v224 = vpop.permute.xlu0 %223
        %v226 = vld [vmem:[%s185] sm:$0xff]
        %v227 = vsub.f32 %v226, %v224
        %v228 = vadd.f32 %v227, 0.0
        %v229 = vmul.f32 %v227, %v227
        %v230 = vadd.f32 %v229, 0.0
        %v231 = vld [vmem:[%s206] sm:$0xff]
        %v232 = vadd.f32 %v231, %v228
        %233 = vst [vmem:[%s206] sm:$0xff] %v232
        %v234 = vld [vmem:[%s213] sm:$0xff]
        %v235 = vadd.f32 %v234, %v230
        %236 = vst [vmem:[%s213] sm:$0xff] %v235
        %s237 = sand.u32 %s93, 1
        %s238 = scalar_lea.sflag [#allocation4], %s237
        %s239 = sand.u32 %s93, 1
        %s240 = smul.addr %s239, 8
        %s241 = scalar_lea.vmem [#allocation5], %s240
        %s242 = sand.u32 %s119, 1
        %s243 = scalar_lea.sflag [#allocation7], %s242
        %s244 = sand.u32 %s119, 1
        %s245 = smul.addr %s244, 8
        %s246 = scalar_lea.vmem [#allocation6], %s245
        // Predicated region
        $region37: #{tpu_custom_call.1} parent=27 // pred_check
          %p247 = pneg %p103
        $region38: #{tpu_custom_call.1} parent=27 // pred_check_branch
          %249 = sbr.rel (%p247) target = $region40
        $region39: #{tpu_custom_call.1} parent=27 // pred_region
          %251 = vsyncadd %s238, 0
          %s252 = smul.addr %s28, 8
          %s253 = scalar_lea.hbm %s2, %s252
          %s255 = sshll.u32 %s241, 4
          %s256 = int_to_ptr.vmem [resolvable:$true] %s255
          %s257 = sshll.u32 %s253, 4
          %s258 = int_to_ptr.hbm [resolvable:$true] %s257
          %260 = dma.vmem_to_hbm [thread:$0]  %s256, 128, %s258, %s238
        $region40: #{tpu_custom_call.1} parent=27 // pred_fallthru
          _
        // Predicated region
        $region41: #{tpu_custom_call.1} parent=27 // pred_check
          %p261 = pneg %p129
        $region42: #{tpu_custom_call.1} parent=27 // pred_check_branch
          %263 = sbr.rel (%p261) target = $region44
        $region43: #{tpu_custom_call.1} parent=27 // pred_region
          %265 = vsyncadd %s243, 0
          %s266 = smul.addr %s28, 8
          %s267 = scalar_lea.hbm %s3, %s266
          %s269 = sshll.u32 %s246, 4
          %s270 = int_to_ptr.vmem [resolvable:$true] %s269
          %s271 = sshll.u32 %s267, 4
          %s272 = int_to_ptr.hbm [resolvable:$true] %s271
          %274 = dma.vmem_to_hbm [thread:$0]  %s270, 128, %s272, %s243
        $region44: #{tpu_custom_call.1} parent=27 // pred_fallthru
          _
      $region28: #{tpu_custom_call.1} parent=5 // pred_fallthru
        _
      %p275 = scmp.le.s32.totalorder 2, %s19
      // Predicated region
      $region45: #{tpu_custom_call.1} parent=5 // pred_check
        %p276 = pneg %p275
      $region46: #{tpu_custom_call.1} parent=5 // pred_check_branch
        %278 = sbr.rel (%p276) target = $region48
      $region47: #{tpu_custom_call.1} parent=5 // pred_region
        %s279 = ssub.s32 %s19, 2
        // Predicated region
        $region49: #{tpu_custom_call.1} parent=47 // pred_check
          %p280 = pneg %p109
        $region50: #{tpu_custom_call.1} parent=47 // pred_check_branch
          %282 = sbr.rel (%p280) target = $region52
        $region51: #{tpu_custom_call.1} parent=47 // pred_region
          %s283 = sand.u32 %s94, 1
          %s284 = scalar_lea.sflag [#allocation4], %s283
          %s285 = sand.u32 %s94, 1
          %s286 = smul.addr %s285, 8
          %s287 = scalar_lea.vmem [#allocation5], %s286
          %289 = dma.done %s284, 128
        $region52: #{tpu_custom_call.1} parent=47 // pred_fallthru
          _
        // Predicated region
        $region53: #{tpu_custom_call.1} parent=47 // pred_check
          %p290 = pneg %p135
        $region54: #{tpu_custom_call.1} parent=47 // pred_check_branch
          %292 = sbr.rel (%p290) target = $region56
        $region55: #{tpu_custom_call.1} parent=47 // pred_region
          %s293 = sand.u32 %s120, 1
          %s294 = scalar_lea.sflag [#allocation7], %s293
          %s295 = sand.u32 %s120, 1
          %s296 = smul.addr %s295, 8
          %s297 = scalar_lea.vmem [#allocation6], %s296
          %299 = dma.done %s294, 128
        $region56: #{tpu_custom_call.1} parent=47 // pred_fallthru
          _
      $region48: #{tpu_custom_call.1} parent=5 // pred_fallthru
        _
    $region6: #{tpu_custom_call.1} parent=1 // loop_footer
      %s23 = sadd.s32 1, %s19
    $region7: #{tpu_custom_call.1} parent=1 // loop_footer_branch
      %18 = sbr.rel target = $region3
    $region8: #{tpu_custom_call.1} parent=1 // loop_exit
      _
    %300 = vsyncpa [#allocation3], 1
    %s301 = scalar_lea.sflag [#allocation3], 1
    %302 = vsyncpa %s301, 1
    %303 = vsyncpa [#allocation4], 1
    %s304 = scalar_lea.sflag [#allocation4], 1
    %305 = vsyncpa %s304, 1
    %306 = vsyncpa [#allocation7], 1
    %s307 = scalar_lea.sflag [#allocation7], 1
    %308 = vsyncpa %s307, 1

</llo_original>
